<compile_context>
chip_gen: v5e
topology: v5e:2x2
jax: 0.10.0
libtpu: 0.0.40
codegen_flags: <defaults>
</compile_context>

<pallas_src>
import functools

import jax
import jax.numpy as jnp
from jax.experimental import pallas as pl
from jax.experimental.pallas import tpu as pltpu


def _obj_color_kernel(x_ref, p_ref, out_ref):
    # x_ref  : (G*4, TM) f32, rows per component g: [gmm_w, mean_r, mean_g, mean_b]
    # p_ref  : (H, 6)    f32, cols: [w_r, w_g, w_b, bias, ln_gamma, ln_beta]
    # out_ref: (H, TM)   out_dtype
    x = x_ref[...]
    p = p_ref[...]

    h = p.shape[0]
    tm = x.shape[1]
    num_g = x.shape[0] // 4

    # Loop-invariant parameter column slices (hoisted once; zero-cost views).
    w0 = p[:, 0:1]      # (H, 1)
    w1 = p[:, 1:2]
    w2 = p[:, 2:3]
    bias = p[:, 3:4]
    gamma = p[:, 4:5]
    beta = p[:, 5:6]
    inv_h = 1.0 / h     # static Python scalar

    acc = jnp.zeros((h, tm), jnp.float32)
    for g in range(num_g):  # G is tiny (e.g. 3): static unroll, 2-D slabs only
        r = 4 * g
        wgt = x[r:r + 1, :]        # (1, TM) gmm weight
        mx = x[r + 1:r + 2, :]     # (1, TM)
        my = x[r + 2:r + 3, :]
        mz = x[r + 3:r + 4, :]

        # Linear(3 -> H) as an unrolled 3-term VPU FMA (no MXU for K=3):
        # outer-product broadcasts (H,1)x(1,TM) fuse into the multiplies.
        lin = w0 * mx + w1 * my + w2 * mz + bias           # (H, TM)
        act = jnp.maximum(lin, 0.0)                         # ReLU

        # LayerNorm over H (sublane axis).  sum / sum-of-squares form: the two
        # reductions are independent so they can overlap on the reduce unit.
        s = jnp.sum(act, axis=0, keepdims=True)             # (1, TM)
        s2 = jnp.sum(act * act, axis=0, keepdims=True)      # (1, TM)
        mu = s * inv_h
        var = jnp.maximum(s2 * inv_h - mu * mu, 0.0)        # clamp FP cancellation
        inv_std = jax.lax.rsqrt(var + 1e-12)                # eps per module spec
        normed = (act - mu) * inv_std * gamma + beta        # (H, TM)

        acc = acc + normed * wgt                            # weighted G-sum

    out_ref[...] = acc.astype(out_ref.dtype)


def _round_up(x, m):
    return ((x + m - 1) // m) * m


@functools.partial(jax.jit, static_argnames=("tile_m", "out_dtype"))
def obj_color_encoder(obj_colors, w, b, gamma, beta, *,
                      tile_m=8192, out_dtype=jnp.float32):
    # obj_colors: (B, O, G, 4);  w: (3, H);  b, gamma, beta: (H,)
    # out_dtype=jnp.bfloat16 halves output HBM traffic if the consumer allows
    # it (accumulation stays f32 in-kernel); default f32 for exactness.
    B, O, G, C = obj_colors.shape
    assert C == 4
    H = w.shape[1]
    M = B * O

    LANE = 128
    m128 = _round_up(max(M, 1), LANE)

    # Number of M-tiles: big tiles amortize per-step overhead; use >= 2 tiles
    # when there is enough work so v7x megacore can shard the M axis.
    n_tiles = max(1, pl.cdiv(m128, _round_up(tile_m, LANE)))
    if m128 >= 2 * LANE:
        n_tiles = max(n_tiles, 2)
    tm = _round_up(pl.cdiv(m128, n_tiles), LANE)
    grid_m = pl.cdiv(m128, tm)
    Mp = grid_m * tm

    # Feature-major input: (G*4, Mp) with M on the lane axis.  Only this tiny
    # ~48 B/row stream is padded; zero columns => gmm_weight 0 => contribute 0.
    xt = obj_colors.reshape(M, G * C).T.astype(jnp.float32)   # (G*4, M)
    if Mp != M:
        xt = jnp.pad(xt, ((0, 0), (0, Mp - M)))

    # Single stacked, grid-invariant parameter block: (H, 6).
    params = jnp.concatenate(
        [w.astype(jnp.float32).T,                 # (H, 3)
         b.reshape(H, 1).astype(jnp.float32),
         gamma.reshape(H, 1).astype(jnp.float32),
         beta.reshape(H, 1).astype(jnp.float32)],
        axis=1)                                    # (H, 6)

    out_t = pl.pallas_call(
        _obj_color_kernel,
        out_shape=jax.ShapeDtypeStruct((H, Mp), out_dtype),
        grid_spec=pltpu.PrefetchScalarGridSpec(
            num_scalar_prefetch=0,
            grid=(grid_m,),
            in_specs=[
                pl.BlockSpec((G * C, tm), lambda i: (0, i)),
                pl.BlockSpec((H, 6), lambda i: (0, 0)),
            ],
            out_specs=pl.BlockSpec((H, tm), lambda i: (0, i)),
        ),
        compiler_params=pltpu.CompilerParams(
            dimension_semantics=("parallel",)),
    )(xt, params)

    # (H, Mp) -> (B, O, H): trailing slice + transpose fuse into one small copy.
    return out_t[:, :M].T.reshape(B, O, H)


def _reference(obj_colors, w, b, gamma, beta):
    gmm_w = obj_colors[..., :1]
    means = obj_colors[..., 1:]
    lin = means @ w + b
    act = jnp.maximum(lin, 0.0)
    mu = jnp.mean(act, axis=-1, keepdims=True)
    var = jnp.mean(jnp.square(act - mu), axis=-1, keepdims=True)
    normed = (act - mu) * jax.lax.rsqrt(var + 1e-12) * gamma + beta
    return jnp.sum(normed * gmm_w, axis=2)


if __name__ == "__main__":
    key = jax.random.PRNGKey(0)
    k1, k2, k3, k4, k5 = jax.random.split(key, 5)

    B, O, G, H = 2, 8, 3, 32   # batch, num objects, gmm components, hidden size

    obj_colors = jax.random.uniform(k1, (B, O, G, 4), dtype=jnp.float32)

    # Deterministic parameter init (synthetic, not a checkpoint).
    w = jax.random.normal(k2, (3, H), dtype=jnp.float32) * 0.5          # Linear weight (in, out)
    b = jax.random.normal(k3, (H,), dtype=jnp.float32) * 0.1            # Linear bias
    gamma = 1.0 + 0.1 * jax.random.normal(k4, (H,), dtype=jnp.float32)  # LN weight
    beta = 0.1 * jax.random.normal(k5, (H,), dtype=jnp.float32)         # LN bias

    out = obj_color_encoder(obj_colors, w, b, gamma, beta)
    out = jax.block_until_ready(out)

    ref = _reference(obj_colors, w, b, gamma, beta)
    assert out.shape == (B, O, H)
    # Tolerance accommodates the sum/sum-of-squares LayerNorm-variance form
    # (mathematically identical; ~1e-6-scale FP difference vs the two-pass ref).
    assert jnp.allclose(out, ref, atol=2e-5, rtol=2e-5)

    print("KERNEL_OK")
</pallas_src>

<mosaic_0001>
module attributes {stable_mosaic.version = 11 : i64} {
  func.func @_obj_color_kernel(%arg0: i32, %arg1: memref<12x128xf32, #tpu.memory_space<vmem>>, %arg2: memref<32x6xf32, #tpu.memory_space<vmem>>, %arg3: memref<32x128xf32, #tpu.memory_space<vmem>>) attributes {dimension_semantics = [#tpu.dimension_semantics<parallel>], iteration_bounds = array<i64: 1>, scalar_prefetch = 0 : i64, scratch_operands = 0 : i64, tpu.core_type = #tpu.core_type<tc>, window_params = [{transform_indices = @transform_0, window_bounds = array<i64: 12, 128>}, {pipeline_mode = #tpu.pipeline_mode<synchronous>, transform_indices = @transform_1, window_bounds = array<i64: 32, 6>}, {transform_indices = @transform_2, window_bounds = array<i64: 32, 128>}]} {
    %c0 = arith.constant 0 : index
    %c0_0 = arith.constant 0 : index
    %0 = vector.load %arg1[%c0, %c0_0] : memref<12x128xf32, #tpu.memory_space<vmem>>, vector<12x128xf32>
    %c0_1 = arith.constant 0 : index
    %c0_2 = arith.constant 0 : index
    %1 = vector.load %arg2[%c0_1, %c0_2] : memref<32x6xf32, #tpu.memory_space<vmem>>, vector<32x6xf32>
    %2 = vector.extract_strided_slice %1 {offsets = [0, 0], sizes = [32, 1], strides = [1, 1]} : vector<32x6xf32> to vector<32x1xf32>
    %3 = vector.extract_strided_slice %1 {offsets = [0, 1], sizes = [32, 1], strides = [1, 1]} : vector<32x6xf32> to vector<32x1xf32>
    %4 = vector.extract_strided_slice %1 {offsets = [0, 2], sizes = [32, 1], strides = [1, 1]} : vector<32x6xf32> to vector<32x1xf32>
    %5 = vector.extract_strided_slice %1 {offsets = [0, 3], sizes = [32, 1], strides = [1, 1]} : vector<32x6xf32> to vector<32x1xf32>
    %6 = vector.extract_strided_slice %1 {offsets = [0, 4], sizes = [32, 1], strides = [1, 1]} : vector<32x6xf32> to vector<32x1xf32>
    %7 = vector.extract_strided_slice %1 {offsets = [0, 5], sizes = [32, 1], strides = [1, 1]} : vector<32x6xf32> to vector<32x1xf32>
    %cst = arith.constant 0.000000e+00 : f32
    %8 = vector.broadcast %cst : f32 to vector<32x128xf32>
    %9 = vector.extract_strided_slice %0 {offsets = [0, 0], sizes = [1, 128], strides = [1, 1]} : vector<12x128xf32> to vector<1x128xf32>
    %10 = vector.extract_strided_slice %0 {offsets = [1, 0], sizes = [1, 128], strides = [1, 1]} : vector<12x128xf32> to vector<1x128xf32>
    %11 = vector.extract_strided_slice %0 {offsets = [2, 0], sizes = [1, 128], strides = [1, 1]} : vector<12x128xf32> to vector<1x128xf32>
    %12 = vector.extract_strided_slice %0 {offsets = [3, 0], sizes = [1, 128], strides = [1, 1]} : vector<12x128xf32> to vector<1x128xf32>
    %13 = vector.broadcast %2 : vector<32x1xf32> to vector<32x128xf32>
    %14 = vector.broadcast %10 : vector<1x128xf32> to vector<32x128xf32>
    %15 = arith.mulf %13, %14 : vector<32x128xf32>
    %16 = vector.broadcast %3 : vector<32x1xf32> to vector<32x128xf32>
    %17 = vector.broadcast %11 : vector<1x128xf32> to vector<32x128xf32>
    %18 = arith.mulf %16, %17 : vector<32x128xf32>
    %19 = arith.addf %15, %18 : vector<32x128xf32>
    %20 = vector.broadcast %4 : vector<32x1xf32> to vector<32x128xf32>
    %21 = vector.broadcast %12 : vector<1x128xf32> to vector<32x128xf32>
    %22 = arith.mulf %20, %21 : vector<32x128xf32>
    %23 = arith.addf %19, %22 : vector<32x128xf32>
    %24 = vector.broadcast %5 : vector<32x1xf32> to vector<32x128xf32>
    %25 = arith.addf %23, %24 : vector<32x128xf32>
    %cst_3 = arith.constant 0.000000e+00 : f32
    %26 = vector.broadcast %cst_3 : f32 to vector<32x128xf32>
    %27 = arith.maximumf %25, %26 : vector<32x128xf32>
    %cst_4 = arith.constant dense<0.000000e+00> : vector<128xf32>
    %28 = vector.multi_reduction <add>, %27, %cst_4 [0] : vector<32x128xf32> to vector<128xf32>
    %29 = vector.shape_cast %28 : vector<128xf32> to vector<1x128xf32>
    %30 = arith.mulf %27, %27 : vector<32x128xf32>
    %cst_5 = arith.constant dense<0.000000e+00> : vector<128xf32>
    %31 = vector.multi_reduction <add>, %30, %cst_5 [0] : vector<32x128xf32> to vector<128xf32>
    %32 = vector.shape_cast %31 : vector<128xf32> to vector<1x128xf32>
    %cst_6 = arith.constant 3.125000e-02 : f32
    %33 = vector.broadcast %cst_6 : f32 to vector<1x128xf32>
    %34 = arith.mulf %29, %33 : vector<1x128xf32>
    %cst_7 = arith.constant 3.125000e-02 : f32
    %35 = vector.broadcast %cst_7 : f32 to vector<1x128xf32>
    %36 = arith.mulf %32, %35 : vector<1x128xf32>
    %37 = arith.mulf %34, %34 : vector<1x128xf32>
    %38 = arith.subf %36, %37 : vector<1x128xf32>
    %cst_8 = arith.constant 0.000000e+00 : f32
    %39 = vector.broadcast %cst_8 : f32 to vector<1x128xf32>
    %40 = arith.maximumf %38, %39 : vector<1x128xf32>
    %cst_9 = arith.constant 9.99999996E-13 : f32
    %41 = vector.broadcast %cst_9 : f32 to vector<1x128xf32>
    %42 = arith.addf %40, %41 : vector<1x128xf32>
    %43 = math.rsqrt %42 : vector<1x128xf32>
    %44 = vector.broadcast %34 : vector<1x128xf32> to vector<32x128xf32>
    %45 = arith.subf %27, %44 : vector<32x128xf32>
    %46 = vector.broadcast %43 : vector<1x128xf32> to vector<32x128xf32>
    %47 = arith.mulf %45, %46 : vector<32x128xf32>
    %48 = vector.broadcast %6 : vector<32x1xf32> to vector<32x128xf32>
    %49 = arith.mulf %47, %48 : vector<32x128xf32>
    %50 = vector.broadcast %7 : vector<32x1xf32> to vector<32x128xf32>
    %51 = arith.addf %49, %50 : vector<32x128xf32>
    %52 = vector.broadcast %9 : vector<1x128xf32> to vector<32x128xf32>
    %53 = arith.mulf %51, %52 : vector<32x128xf32>
    %54 = arith.addf %8, %53 : vector<32x128xf32>
    %55 = vector.extract_strided_slice %0 {offsets = [4, 0], sizes = [1, 128], strides = [1, 1]} : vector<12x128xf32> to vector<1x128xf32>
    %56 = vector.extract_strided_slice %0 {offsets = [5, 0], sizes = [1, 128], strides = [1, 1]} : vector<12x128xf32> to vector<1x128xf32>
    %57 = vector.extract_strided_slice %0 {offsets = [6, 0], sizes = [1, 128], strides = [1, 1]} : vector<12x128xf32> to vector<1x128xf32>
    %58 = vector.extract_strided_slice %0 {offsets = [7, 0], sizes = [1, 128], strides = [1, 1]} : vector<12x128xf32> to vector<1x128xf32>
    %59 = vector.broadcast %2 : vector<32x1xf32> to vector<32x128xf32>
    %60 = vector.broadcast %56 : vector<1x128xf32> to vector<32x128xf32>
    %61 = arith.mulf %59, %60 : vector<32x128xf32>
    %62 = vector.broadcast %3 : vector<32x1xf32> to vector<32x128xf32>
    %63 = vector.broadcast %57 : vector<1x128xf32> to vector<32x128xf32>
    %64 = arith.mulf %62, %63 : vector<32x128xf32>
    %65 = arith.addf %61, %64 : vector<32x128xf32>
    %66 = vector.broadcast %4 : vector<32x1xf32> to vector<32x128xf32>
    %67 = vector.broadcast %58 : vector<1x128xf32> to vector<32x128xf32>
    %68 = arith.mulf %66, %67 : vector<32x128xf32>
    %69 = arith.addf %65, %68 : vector<32x128xf32>
    %70 = vector.broadcast %5 : vector<32x1xf32> to vector<32x128xf32>
    %71 = arith.addf %69, %70 : vector<32x128xf32>
    %cst_10 = arith.constant 0.000000e+00 : f32
    %72 = vector.broadcast %cst_10 : f32 to vector<32x128xf32>
    %73 = arith.maximumf %71, %72 : vector<32x128xf32>
    %cst_11 = arith.constant dense<0.000000e+00> : vector<128xf32>
    %74 = vector.multi_reduction <add>, %73, %cst_11 [0] : vector<32x128xf32> to vector<128xf32>
    %75 = vector.shape_cast %74 : vector<128xf32> to vector<1x128xf32>
    %76 = arith.mulf %73, %73 : vector<32x128xf32>
    %cst_12 = arith.constant dense<0.000000e+00> : vector<128xf32>
    %77 = vector.multi_reduction <add>, %76, %cst_12 [0] : vector<32x128xf32> to vector<128xf32>
    %78 = vector.shape_cast %77 : vector<128xf32> to vector<1x128xf32>
    %cst_13 = arith.constant 3.125000e-02 : f32
    %79 = vector.broadcast %cst_13 : f32 to vector<1x128xf32>
    %80 = arith.mulf %75, %79 : vector<1x128xf32>
    %cst_14 = arith.constant 3.125000e-02 : f32
    %81 = vector.broadcast %cst_14 : f32 to vector<1x128xf32>
    %82 = arith.mulf %78, %81 : vector<1x128xf32>
    %83 = arith.mulf %80, %80 : vector<1x128xf32>
    %84 = arith.subf %82, %83 : vector<1x128xf32>
    %cst_15 = arith.constant 0.000000e+00 : f32
    %85 = vector.broadcast %cst_15 : f32 to vector<1x128xf32>
    %86 = arith.maximumf %84, %85 : vector<1x128xf32>
    %cst_16 = arith.constant 9.99999996E-13 : f32
    %87 = vector.broadcast %cst_16 : f32 to vector<1x128xf32>
    %88 = arith.addf %86, %87 : vector<1x128xf32>
    %89 = math.rsqrt %88 : vector<1x128xf32>
    %90 = vector.broadcast %80 : vector<1x128xf32> to vector<32x128xf32>
    %91 = arith.subf %73, %90 : vector<32x128xf32>
    %92 = vector.broadcast %89 : vector<1x128xf32> to vector<32x128xf32>
    %93 = arith.mulf %91, %92 : vector<32x128xf32>
    %94 = vector.broadcast %6 : vector<32x1xf32> to vector<32x128xf32>
    %95 = arith.mulf %93, %94 : vector<32x128xf32>
    %96 = vector.broadcast %7 : vector<32x1xf32> to vector<32x128xf32>
    %97 = arith.addf %95, %96 : vector<32x128xf32>
    %98 = vector.broadcast %55 : vector<1x128xf32> to vector<32x128xf32>
    %99 = arith.mulf %97, %98 : vector<32x128xf32>
    %100 = arith.addf %54, %99 : vector<32x128xf32>
    %101 = vector.extract_strided_slice %0 {offsets = [8, 0], sizes = [1, 128], strides = [1, 1]} : vector<12x128xf32> to vector<1x128xf32>
    %102 = vector.extract_strided_slice %0 {offsets = [9, 0], sizes = [1, 128], strides = [1, 1]} : vector<12x128xf32> to vector<1x128xf32>
    %103 = vector.extract_strided_slice %0 {offsets = [10, 0], sizes = [1, 128], strides = [1, 1]} : vector<12x128xf32> to vector<1x128xf32>
    %104 = vector.extract_strided_slice %0 {offsets = [11, 0], sizes = [1, 128], strides = [1, 1]} : vector<12x128xf32> to vector<1x128xf32>
    %105 = vector.broadcast %2 : vector<32x1xf32> to vector<32x128xf32>
    %106 = vector.broadcast %102 : vector<1x128xf32> to vector<32x128xf32>
    %107 = arith.mulf %105, %106 : vector<32x128xf32>
    %108 = vector.broadcast %3 : vector<32x1xf32> to vector<32x128xf32>
    %109 = vector.broadcast %103 : vector<1x128xf32> to vector<32x128xf32>
    %110 = arith.mulf %108, %109 : vector<32x128xf32>
    %111 = arith.addf %107, %110 : vector<32x128xf32>
    %112 = vector.broadcast %4 : vector<32x1xf32> to vector<32x128xf32>
    %113 = vector.broadcast %104 : vector<1x128xf32> to vector<32x128xf32>
    %114 = arith.mulf %112, %113 : vector<32x128xf32>
    %115 = arith.addf %111, %114 : vector<32x128xf32>
    %116 = vector.broadcast %5 : vector<32x1xf32> to vector<32x128xf32>
    %117 = arith.addf %115, %116 : vector<32x128xf32>
    %cst_17 = arith.constant 0.000000e+00 : f32
    %118 = vector.broadcast %cst_17 : f32 to vector<32x128xf32>
    %119 = arith.maximumf %117, %118 : vector<32x128xf32>
    %cst_18 = arith.constant dense<0.000000e+00> : vector<128xf32>
    %120 = vector.multi_reduction <add>, %119, %cst_18 [0] : vector<32x128xf32> to vector<128xf32>
    %121 = vector.shape_cast %120 : vector<128xf32> to vector<1x128xf32>
    %122 = arith.mulf %119, %119 : vector<32x128xf32>
    %cst_19 = arith.constant dense<0.000000e+00> : vector<128xf32>
    %123 = vector.multi_reduction <add>, %122, %cst_19 [0] : vector<32x128xf32> to vector<128xf32>
    %124 = vector.shape_cast %123 : vector<128xf32> to vector<1x128xf32>
    %cst_20 = arith.constant 3.125000e-02 : f32
    %125 = vector.broadcast %cst_20 : f32 to vector<1x128xf32>
    %126 = arith.mulf %121, %125 : vector<1x128xf32>
    %cst_21 = arith.constant 3.125000e-02 : f32
    %127 = vector.broadcast %cst_21 : f32 to vector<1x128xf32>
    %128 = arith.mulf %124, %127 : vector<1x128xf32>
    %129 = arith.mulf %126, %126 : vector<1x128xf32>
    %130 = arith.subf %128, %129 : vector<1x128xf32>
    %cst_22 = arith.constant 0.000000e+00 : f32
    %131 = vector.broadcast %cst_22 : f32 to vector<1x128xf32>
    %132 = arith.maximumf %130, %131 : vector<1x128xf32>
    %cst_23 = arith.constant 9.99999996E-13 : f32
    %133 = vector.broadcast %cst_23 : f32 to vector<1x128xf32>
    %134 = arith.addf %132, %133 : vector<1x128xf32>
    %135 = math.rsqrt %134 : vector<1x128xf32>
    %136 = vector.broadcast %126 : vector<1x128xf32> to vector<32x128xf32>
    %137 = arith.subf %119, %136 : vector<32x128xf32>
    %138 = vector.broadcast %135 : vector<1x128xf32> to vector<32x128xf32>
    %139 = arith.mulf %137, %138 : vector<32x128xf32>
    %140 = vector.broadcast %6 : vector<32x1xf32> to vector<32x128xf32>
    %141 = arith.mulf %139, %140 : vector<32x128xf32>
    %142 = vector.broadcast %7 : vector<32x1xf32> to vector<32x128xf32>
    %143 = arith.addf %141, %142 : vector<32x128xf32>
    %144 = vector.broadcast %101 : vector<1x128xf32> to vector<32x128xf32>
    %145 = arith.mulf %143, %144 : vector<32x128xf32>
    %146 = arith.addf %100, %145 : vector<32x128xf32>
    %c0_24 = arith.constant 0 : index
    %c0_25 = arith.constant 0 : index
    %147 = vector.load %arg3[%c0_24, %c0_25] : memref<32x128xf32, #tpu.memory_space<vmem>>, vector<32x128xf32>
    tpu.vector_store %arg3[%c0_24, %c0_25], %146 {strides = array<i32>} : memref<32x128xf32, #tpu.memory_space<vmem>>, vector<32x128xf32>,
    return
  }
  func.func @transform_0(%arg0: i32) -> (i32, i32) {
    %c0_i32 = arith.constant 0 : i32
    %c0_i32_0 = arith.constant 0 : i32
    return %c0_i32, %arg0 : i32, i32
  }
  func.func @transform_1(%arg0: i32) -> (i32, i32) {
    %c0_i32 = arith.constant 0 : i32
    %c0_i32_0 = arith.constant 0 : i32
    %c0_i32_1 = arith.constant 0 : i32
    return %c0_i32, %c0_i32_0 : i32, i32
  }
  func.func @transform_2(%arg0: i32) -> (i32, i32) {
    %c0_i32 = arith.constant 0 : i32
    %c0_i32_0 = arith.constant 0 : i32
    return %c0_i32, %arg0 : i32, i32
  }
}

</mosaic_0001>

<llo_original>
// kernel: obj_color_encoder.1
$region0: #{obj_color_encoder.1}
  #allocation0 [shape = 'u32[]', space=smem, size = 0x4, offset = 0x4, fixed_abs, tag = 'smem constant byte address 0x4 - core index']
  #allocation1 [shape = 'u32[72,128]{1,0:T(1,128)}', space=vmem, size = 0x9000, scoped, tag = 'internal scratch']
  %s0 = inlined_call_operand.vmem [shape: f32[12,128], index: 0, kind: input, shape index: {}]
  %s1 = inlined_call_operand.vmem [shape: f32[32,6], index: 1, kind: input, shape index: {}]
  %s2 = inlined_call_operand.vmem [shape: f32[32,128], index: 2, kind: output, shape index: {}]
  %s3 = sld [smem:[#allocation0]]
  $region18: #{obj_color_encoder.1} parent=0
    _
  %s5 = ssub.s32 1, %s3
  %s6 = scalar_select 0, %s5, %s3
  // Predicated region
  $region2: #{obj_color_encoder.1} parent=0 // pred_check
    _
  $region3: #{obj_color_encoder.1} parent=0 // pred_check_branch
    %8 = sbr.rel (0) target = $region5
  $region4: #{obj_color_encoder.1} parent=0 // pred_region
    _
  $region5: #{obj_color_encoder.1} parent=0 // pred_fallthru
    _
  // Predicated region
  $region6: #{obj_color_encoder.1} parent=0 // pred_check
    _
  $region7: #{obj_color_encoder.1} parent=0 // pred_check_branch
    %10 = sbr.rel (0) target = $region9
  $region8: #{obj_color_encoder.1} parent=0 // pred_region
    _
  $region9: #{obj_color_encoder.1} parent=0 // pred_fallthru
    _
  %v11 = vld [vmem:[%s0] sm:$0xff]
  %v12 = vld [vmem:[%s0 + $0x8] sm:$0xf]
  %v13 = vld [vmem:[%s1] sm:$0xff]
  %v14 = vld [vmem:[%s1 + $0x8] sm:$0xff]
  %v15 = vld [vmem:[%s1 + $0x10] sm:$0xff]
  %v16 = vld [vmem:[%s1 + $0x18] sm:$0xff]
  %18 = vset.pattern.permute.xlu0 0
  %19 = vperm.xlu0 %18, %v13
  %v20 = vpop.permute.xlu0 %19
  %23 = vset.pattern.permute.xlu0 0
  %24 = vperm.xlu0 %23, %v14
  %v25 = vpop.permute.xlu0 %24
  %28 = vset.pattern.permute.xlu0 0
  %29 = vperm.xlu0 %28, %v15
  %v30 = vpop.permute.xlu0 %29
  %33 = vset.pattern.permute.xlu0 0
  %34 = vperm.xlu0 %33, %v16
  %v35 = vpop.permute.xlu0 %34
  %v37 = vperm.slane %v11, 1
  %v38 = vmul.f32 %v20, %v37
  %v39 = vmul.f32 %v25, %v37
  %v40 = vmul.f32 %v30, %v37
  %v41 = vmul.f32 %v35, %v37
  %42 = vset.pattern.permute.xlu0 1
  %43 = vperm.xlu0 %42, %v13
  %v44 = vpop.permute.xlu0 %43
  %46 = vset.pattern.permute.xlu0 1
  %47 = vperm.xlu0 %46, %v14
  %v48 = vpop.permute.xlu0 %47
  %50 = vset.pattern.permute.xlu0 1
  %51 = vperm.xlu0 %50, %v15
  %v52 = vpop.permute.xlu0 %51
  %54 = vset.pattern.permute.xlu0 1
  %55 = vperm.xlu0 %54, %v16
  %v56 = vpop.permute.xlu0 %55
  %v58 = vperm.slane %v11, 2
  %v59 = vmul.f32 %v44, %v58
  %v60 = vmul.f32 %v48, %v58
  %v61 = vmul.f32 %v52, %v58
  %v62 = vmul.f32 %v56, %v58
  %v63 = vadd.f32 %v38, %v59
  %v64 = vadd.f32 %v39, %v60
  %v65 = vadd.f32 %v40, %v61
  %v66 = vadd.f32 %v41, %v62
  %67 = vset.pattern.permute.xlu0 2
  %68 = vperm.xlu0 %67, %v13
  %v69 = vpop.permute.xlu0 %68
  %71 = vset.pattern.permute.xlu0 2
  %72 = vperm.xlu0 %71, %v14
  %v73 = vpop.permute.xlu0 %72
  %75 = vset.pattern.permute.xlu0 2
  %76 = vperm.xlu0 %75, %v15
  %v77 = vpop.permute.xlu0 %76
  %79 = vset.pattern.permute.xlu0 2
  %80 = vperm.xlu0 %79, %v16
  %v81 = vpop.permute.xlu0 %80
  %v83 = vperm.slane %v11, 3
  %v84 = vmul.f32 %v69, %v83
  %v85 = vmul.f32 %v73, %v83
  %v86 = vmul.f32 %v77, %v83
  %v87 = vmul.f32 %v81, %v83
  %v88 = vadd.f32 %v63, %v84
  %v89 = vadd.f32 %v64, %v85
  %v90 = vadd.f32 %v65, %v86
  %v91 = vadd.f32 %v66, %v87
  %92 = vset.pattern.permute.xlu0 3
  %93 = vperm.xlu0 %92, %v13
  %v94 = vpop.permute.xlu0 %93
  %96 = vset.pattern.permute.xlu0 3
  %97 = vperm.xlu0 %96, %v14
  %v98 = vpop.permute.xlu0 %97
  %100 = vset.pattern.permute.xlu0 3
  %101 = vperm.xlu0 %100, %v15
  %v102 = vpop.permute.xlu0 %101
  %104 = vset.pattern.permute.xlu0 3
  %105 = vperm.xlu0 %104, %v16
  %v106 = vpop.permute.xlu0 %105
  %v108 = vadd.f32 %v88, %v94
  %v109 = vadd.f32 %v89, %v98
  %v110 = vadd.f32 %v90, %v102
  %v111 = vadd.f32 %v91, %v106
  %v112 = vmax.f32 %v108, 0.0
  %v113 = vmax.f32 %v109, 0.0
  %v114 = vmax.f32 %v110, 0.0
  %v115 = vmax.f32 %v111, 0.0
  %v116 = vadd.f32 %v112, %v113
  %v117 = vadd.f32 %v116, %v114
  %v118 = vadd.f32 %v117, %v115
  %v119 = vrot.slane %v118, 4
  %v120 = vadd.f32 %v118, %v119
  %v121 = vrot.slane %v120, 2
  %v122 = vadd.f32 %v120, %v121
  %v123 = vrot.slane %v122, 1
  %v124 = vadd.f32 %v122, %v123
  %v125 = vmul.f32 %v112, %v112
  %v126 = vmul.f32 %v113, %v113
  %v127 = vmul.f32 %v114, %v114
  %v128 = vmul.f32 %v115, %v115
  %v129 = vadd.f32 %v125, %v126
  %v130 = vadd.f32 %v129, %v127
  %v131 = vadd.f32 %v130, %v128
  %v132 = vrot.slane %v131, 4
  %v133 = vadd.f32 %v131, %v132
  %v134 = vrot.slane %v133, 2
  %v135 = vadd.f32 %v133, %v134
  %v136 = vrot.slane %v135, 1
  %v137 = vadd.f32 %v135, %v136
  %v138 = vmul.f32 %v124, 0.03125
  %v139 = vmul.f32 %v137, 0.03125
  %v140 = vmul.f32 %v138, %v138
  %v141 = vsub.f32 %v139, %v140
  %v142 = vmax.f32 %v141, 0.0
  %v143 = vadd.f32 %v142, 1e-12
  %v144 = vrsqrt.pop %v143
  %v145 = vmul.f32 %v144, %v143
  %v146 = vmul.f32 %v145, %v144
  %v147 = vmul.f32 0.5, %v146
  %v148 = vsub.f32 1.5, %v147
  %v149 = vmul.f32 %v144, %v148
  %vm150 = vweird.f32 %v143
  %vm151 = vweird.f32 %v144
  %vm152 = vmor %vm150, %vm151
  %v153 = vsel %vm152, %v144, %v149
  %v154 = vsub.f32 %v112, %v138
  %v155 = vsub.f32 %v113, %v138
  %v156 = vsub.f32 %v114, %v138
  %v157 = vsub.f32 %v115, %v138
  %v158 = vmul.f32 %v154, %v153
  %v159 = vmul.f32 %v155, %v153
  %v160 = vmul.f32 %v156, %v153
  %v161 = vmul.f32 %v157, %v153
  %162 = vset.pattern.permute.xlu0 4
  %163 = vperm.xlu0 %162, %v13
  %v164 = vpop.permute.xlu0 %163
  %166 = vset.pattern.permute.xlu0 4
  %167 = vperm.xlu0 %166, %v14
  %v168 = vpop.permute.xlu0 %167
  %170 = vset.pattern.permute.xlu0 4
  %171 = vperm.xlu0 %170, %v15
  %v172 = vpop.permute.xlu0 %171
  %174 = vset.pattern.permute.xlu0 4
  %175 = vperm.xlu0 %174, %v16
  %v176 = vpop.permute.xlu0 %175
  %v178 = vmul.f32 %v158, %v164
  %v179 = vmul.f32 %v159, %v168
  %v180 = vmul.f32 %v160, %v172
  %v181 = vmul.f32 %v161, %v176
  %182 = vset.pattern.permute.xlu0 5
  %183 = vperm.xlu0 %182, %v13
  %v184 = vpop.permute.xlu0 %183
  %186 = vset.pattern.permute.xlu0 5
  %187 = vperm.xlu0 %186, %v14
  %v188 = vpop.permute.xlu0 %187
  %190 = vset.pattern.permute.xlu0 5
  %191 = vperm.xlu0 %190, %v15
  %v192 = vpop.permute.xlu0 %191
  %194 = vset.pattern.permute.xlu0 5
  %195 = vperm.xlu0 %194, %v16
  %v196 = vpop.permute.xlu0 %195
  %v198 = vadd.f32 %v178, %v184
  %v199 = vadd.f32 %v179, %v188
  %v200 = vadd.f32 %v180, %v192
  %v201 = vadd.f32 %v181, %v196
  %v202 = vperm.slane %v11, 0
  %v203 = vmul.f32 %v198, %v202
  %v204 = vmul.f32 %v199, %v202
  %v205 = vmul.f32 %v200, %v202
  %v206 = vmul.f32 %v201, %v202
  %v207 = vadd.f32 %v203, 0.0
  %v208 = vadd.f32 %v204, 0.0
  %v209 = vadd.f32 %v205, 0.0
  %v210 = vadd.f32 %v206, 0.0
  %v211 = vperm.slane %v11, 5
  %v212 = vmul.f32 %v20, %v211
  %v213 = vmul.f32 %v25, %v211
  %v214 = vmul.f32 %v30, %v211
  %v215 = vmul.f32 %v35, %v211
  %v216 = vperm.slane %v11, 6
  %v217 = vmul.f32 %v44, %v216
  %v218 = vmul.f32 %v48, %v216
  %v219 = vmul.f32 %v52, %v216
  %v220 = vmul.f32 %v56, %v216
  %v221 = vadd.f32 %v212, %v217
  %v222 = vadd.f32 %v213, %v218
  %v223 = vadd.f32 %v214, %v219
  %v224 = vadd.f32 %v215, %v220
  %v225 = vperm.slane %v11, 7
  %v226 = vmul.f32 %v69, %v225
  %v227 = vmul.f32 %v73, %v225
  %v228 = vmul.f32 %v77, %v225
  %v229 = vmul.f32 %v81, %v225
  %v230 = vadd.f32 %v221, %v226
  %v231 = vadd.f32 %v222, %v227
  %v232 = vadd.f32 %v223, %v228
  %v233 = vadd.f32 %v224, %v229
  %v234 = vadd.f32 %v230, %v94
  %v235 = vadd.f32 %v231, %v98
  %v236 = vadd.f32 %v232, %v102
  %v237 = vadd.f32 %v233, %v106
  %v238 = vmax.f32 %v234, 0.0
  %v239 = vmax.f32 %v235, 0.0
  %v240 = vmax.f32 %v236, 0.0
  %v241 = vmax.f32 %v237, 0.0
  %v242 = vadd.f32 %v238, %v239
  %v243 = vadd.f32 %v242, %v240
  %v244 = vadd.f32 %v243, %v241
  %v245 = vrot.slane %v244, 4
  %v246 = vadd.f32 %v244, %v245
  %v247 = vrot.slane %v246, 2
  %v248 = vadd.f32 %v246, %v247
  %v249 = vrot.slane %v248, 1
  %v250 = vadd.f32 %v248, %v249
  %v251 = vmul.f32 %v238, %v238
  %v252 = vmul.f32 %v239, %v239
  %v253 = vmul.f32 %v240, %v240
  %v254 = vmul.f32 %v241, %v241
  %v255 = vadd.f32 %v251, %v252
  %v256 = vadd.f32 %v255, %v253
  %v257 = vadd.f32 %v256, %v254
  %v258 = vrot.slane %v257, 4
  %v259 = vadd.f32 %v257, %v258
  %v260 = vrot.slane %v259, 2
  %v261 = vadd.f32 %v259, %v260
  %v262 = vrot.slane %v261, 1
  %v263 = vadd.f32 %v261, %v262
  %v264 = vmul.f32 %v250, 0.03125
  %v265 = vmul.f32 %v263, 0.03125
  %v266 = vmul.f32 %v264, %v264
  %v267 = vsub.f32 %v265, %v266
  %v268 = vmax.f32 %v267, 0.0
  %v269 = vadd.f32 %v268, 1e-12
  %v270 = vrsqrt.pop %v269
  %v271 = vmul.f32 %v270, %v269
  %v272 = vmul.f32 %v271, %v270
  %v273 = vmul.f32 0.5, %v272
  %v274 = vsub.f32 1.5, %v273
  %v275 = vmul.f32 %v270, %v274
  %vm276 = vweird.f32 %v269
  %vm277 = vweird.f32 %v270
  %vm278 = vmor %vm276, %vm277
  %v279 = vsel %vm278, %v270, %v275
  %v280 = vsub.f32 %v238, %v264
  %v281 = vsub.f32 %v239, %v264
  %v282 = vsub.f32 %v240, %v264
  %v283 = vsub.f32 %v241, %v264
  %v284 = vmul.f32 %v280, %v279
  %v285 = vmul.f32 %v281, %v279
  %v286 = vmul.f32 %v282, %v279
  %v287 = vmul.f32 %v283, %v279
  %v288 = vmul.f32 %v284, %v164
  %v289 = vmul.f32 %v285, %v168
  %v290 = vmul.f32 %v286, %v172
  %v291 = vmul.f32 %v287, %v176
  %v292 = vadd.f32 %v288, %v184
  %v293 = vadd.f32 %v289, %v188
  %v294 = vadd.f32 %v290, %v192
  %v295 = vadd.f32 %v291, %v196
  %v296 = vperm.slane %v11, 4
  %v297 = vmul.f32 %v292, %v296
  %v298 = vmul.f32 %v293, %v296
  %v299 = vmul.f32 %v294, %v296
  %v300 = vmul.f32 %v295, %v296
  %v301 = vadd.f32 %v207, %v297
  %v302 = vadd.f32 %v208, %v298
  %v303 = vadd.f32 %v209, %v299
  %v304 = vadd.f32 %v210, %v300
  %v305 = vperm.slane %v12, 1
  %v306 = vmul.f32 %v20, %v305
  %v307 = vmul.f32 %v25, %v305
  %v308 = vmul.f32 %v30, %v305
  %v309 = vmul.f32 %v35, %v305
  %v310 = vperm.slane %v12, 2
  %v311 = vmul.f32 %v44, %v310
  %v312 = vmul.f32 %v48, %v310
  %v313 = vmul.f32 %v52, %v310
  %v314 = vmul.f32 %v56, %v310
  %v315 = vadd.f32 %v306, %v311
  %v316 = vadd.f32 %v307, %v312
  %v317 = vadd.f32 %v308, %v313
  %v318 = vadd.f32 %v309, %v314
  %v319 = vperm.slane %v12, 3
  %v320 = vmul.f32 %v69, %v319
  %v321 = vmul.f32 %v73, %v319
  %v322 = vmul.f32 %v77, %v319
  %v323 = vmul.f32 %v81, %v319
  %v324 = vadd.f32 %v315, %v320
  %v325 = vadd.f32 %v316, %v321
  %v326 = vadd.f32 %v317, %v322
  %v327 = vadd.f32 %v318, %v323
  %v328 = vadd.f32 %v324, %v94
  %v329 = vadd.f32 %v325, %v98
  %v330 = vadd.f32 %v326, %v102
  %v331 = vadd.f32 %v327, %v106
  %v332 = vmax.f32 %v328, 0.0
  %v333 = vmax.f32 %v329, 0.0
  %v334 = vmax.f32 %v330, 0.0
  %v335 = vmax.f32 %v331, 0.0
  %v336 = vadd.f32 %v332, %v333
  %v337 = vadd.f32 %v336, %v334
  %v338 = vadd.f32 %v337, %v335
  %v339 = vrot.slane %v338, 4
  %v340 = vadd.f32 %v338, %v339
  %v341 = vrot.slane %v340, 2
  %v342 = vadd.f32 %v340, %v341
  %v343 = vrot.slane %v342, 1
  %v344 = vadd.f32 %v342, %v343
  %v345 = vmul.f32 %v332, %v332
  %v346 = vmul.f32 %v333, %v333
  %v347 = vmul.f32 %v334, %v334
  %v348 = vmul.f32 %v335, %v335
  %v349 = vadd.f32 %v345, %v346
  %v350 = vadd.f32 %v349, %v347
  %v351 = vadd.f32 %v350, %v348
  %v352 = vrot.slane %v351, 4
  %v353 = vadd.f32 %v351, %v352
  %v354 = vrot.slane %v353, 2
  %v355 = vadd.f32 %v353, %v354
  %v356 = vrot.slane %v355, 1
  %v357 = vadd.f32 %v355, %v356
  %v358 = vmul.f32 %v344, 0.03125
  %v359 = vmul.f32 %v357, 0.03125
  %v360 = vmul.f32 %v358, %v358
  %v361 = vsub.f32 %v359, %v360
  %v362 = vmax.f32 %v361, 0.0
  %v363 = vadd.f32 %v362, 1e-12
  %v364 = vrsqrt.pop %v363
  %v365 = vmul.f32 %v364, %v363
  %v366 = vmul.f32 %v365, %v364
  %v367 = vmul.f32 0.5, %v366
  %v368 = vsub.f32 1.5, %v367
  %v369 = vmul.f32 %v364, %v368
  %vm370 = vweird.f32 %v363
  %vm371 = vweird.f32 %v364
  %vm372 = vmor %vm370, %vm371
  %v373 = vsel %vm372, %v364, %v369
  %v374 = vsub.f32 %v332, %v358
  %v375 = vsub.f32 %v333, %v358
  %v376 = vsub.f32 %v334, %v358
  %v377 = vsub.f32 %v335, %v358
  %v378 = vmul.f32 %v374, %v373
  %v379 = vmul.f32 %v375, %v373
  %v380 = vmul.f32 %v376, %v373
  %v381 = vmul.f32 %v377, %v373
  %v382 = vmul.f32 %v378, %v164
  %v383 = vmul.f32 %v379, %v168
  %v384 = vmul.f32 %v380, %v172
  %v385 = vmul.f32 %v381, %v176
  %v386 = vadd.f32 %v382, %v184
  %v387 = vadd.f32 %v383, %v188
  %v388 = vadd.f32 %v384, %v192
  %v389 = vadd.f32 %v385, %v196
  %v390 = vperm.slane %v12, 0
  %v391 = vmul.f32 %v386, %v390
  %v392 = vmul.f32 %v387, %v390
  %v393 = vmul.f32 %v388, %v390
  %v394 = vmul.f32 %v389, %v390
  %v395 = vadd.f32 %v301, %v391
  %v396 = vadd.f32 %v302, %v392
  %v397 = vadd.f32 %v303, %v393
  %v398 = vadd.f32 %v304, %v394
  %399 = vst [vmem:[%s2] sm:$0xff] %v395
  %400 = vst [vmem:[%s2 + $0x8] sm:$0xff] %v396
  %401 = vst [vmem:[%s2 + $0x10] sm:$0xff] %v397
  %402 = vst [vmem:[%s2 + $0x18] sm:$0xff] %v398
  // Predicated region
  $region10: #{obj_color_encoder.1} parent=0 // pred_check
    _
  $region11: #{obj_color_encoder.1} parent=0 // pred_check_branch
    %404 = sbr.rel (0) target = $region13
  $region12: #{obj_color_encoder.1} parent=0 // pred_region
    _
  $region13: #{obj_color_encoder.1} parent=0 // pred_fallthru
    _
  // Predicated region
  $region14: #{obj_color_encoder.1} parent=0 // pred_check
    _
  $region15: #{obj_color_encoder.1} parent=0 // pred_check_branch
    %406 = sbr.rel (0) target = $region17
  $region16: #{obj_color_encoder.1} parent=0 // pred_region
    _
  $region17: #{obj_color_encoder.1} parent=0 // pred_fallthru
    _

</llo_original>
